<compile_context>
chip_gen: v7x
topology: tpu7x:2x2x1
jax: 0.10.0
libtpu: 0.0.40
codegen_flags: <defaults>
</compile_context>

<pallas_src>
import functools

import jax
import jax.numpy as jnp
import numpy as np
from jax.experimental import pallas as pl
from jax.experimental.pallas import tpu as pltpu


def _fam_kernel(x_ref, w1_ref, b1_ref, w2_ref, b2_ref, mask_ref, o_ref,
                col1_ref, col2_ref, *, wp):
    # x_ref   : (1, Cin, PP)    f32, concat(x1,x2) with zero halo, spatial in lanes
    # w1_ref  : (Cmid, 9*Cin)   bf16, columns ordered (ky, kx, cin)
    # b1_ref  : (Cmid, 1)       f32
    # w2_ref  : (Cout, 9*Cmid)  bf16
    # b2_ref  : (Cout, 1)       f32
    # mask_ref: (1, PP)         f32, 1.0 at interior HxW positions, 0.0 at halo/tail
    # o_ref   : (1, Cout, PP)   f32, lane-dense (PP is a multiple of 128)
    # col1_ref: VMEM (9*Cin, PP)  f32 im2col for conv1
    # col2_ref: VMEM (9*Cmid, PP) f32 im2col for conv2
    cin = x_ref.shape[1]
    cmid = w1_ref.shape[0]
    pp = x_ref.shape[2]

    x = x_ref[0]                                            # (Cin, PP)

    # ---- conv1 im2col: 9 taps via lane rolls (tap offset d -> roll shift -d) ----
    for t in range(9):
        ky, kx = t // 3, t % 3
        d = (ky - 1) * wp + (kx - 1)
        slab = x if d == 0 else pltpu.roll(x, (-d) % pp, axis=1)
        col1_ref[t * cin:(t + 1) * cin, :] = slab           # full-lane, 8-sublane-aligned

    acc1 = jnp.dot(w1_ref[...], col1_ref[...].astype(jnp.bfloat16),
                   preferred_element_type=jnp.float32)      # (Cmid, PP)
    # bias + ReLU in f32; mask zeroes halo & tail so conv2 sees PyTorch's zero padding.
    mid = jnp.maximum(acc1 + b1_ref[...], 0.0) * mask_ref[...]

    # ---- conv2 im2col over the masked intermediate ----
    for t in range(9):
        ky, kx = t // 3, t % 3
        d = (ky - 1) * wp + (kx - 1)
        slab = mid if d == 0 else pltpu.roll(mid, (-d) % pp, axis=1)
        col2_ref[t * cmid:(t + 1) * cmid, :] = slab

    acc2 = jnp.dot(w2_ref[...], col2_ref[...].astype(jnp.bfloat16),
                   preferred_element_type=jnp.float32) + b2_ref[...]

    o_ref[0] = acc2.astype(o_ref.dtype)                     # (Cout, PP) lane-dense store


@jax.jit
def feature_aggregation_forward(x1_nchw, x2_nchw, w1, b1, w2, b2):
    """x1: (N, C1, H, W), x2: (N, C2, H, W), w*: HWIO  ->  (N, Cout, H, W)."""
    N, C1, H, W = x1_nchw.shape
    C2 = x2_nchw.shape[1]
    Cin = C1 + C2
    Cmid = w1.shape[3]
    Cout = w2.shape[3]
    Hp, Wp = H + 2, W + 2
    P = Hp * Wp
    PP = ((P + 127) // 128) * 128            # lane-pad padded-spatial axis to 128 mult

    # NCHW stays NCHW: concat channels, zero-pad spatial halo, flatten spatial into
    # lanes, lane-pad.  No transposes.
    x = jnp.concatenate([x1_nchw, x2_nchw], axis=1).astype(jnp.float32)
    x = jnp.pad(x, ((0, 0), (0, 0), (1, 1), (1, 1)))
    x = x.reshape(N, Cin, P)
    x = jnp.pad(x, ((0, 0), (0, 0), (0, PP - P)))           # (N, Cin, PP)

    # Weights -> (Cout, 9*Cin), columns ordered (ky,kx,cin) to match col row order;
    # bf16 for the MXU.  Biases as (C, 1) lane-broadcast columns (kept f32).
    w1t = w1.astype(jnp.float32).reshape(9 * Cin, Cmid).T.astype(jnp.bfloat16)
    w2t = w2.astype(jnp.float32).reshape(9 * Cmid, Cout).T.astype(jnp.bfloat16)
    b1c = b1.astype(jnp.float32).reshape(Cmid, 1)
    b2c = b2.astype(jnp.float32).reshape(Cout, 1)

    # Interior mask over the padded + lane-padded spatial axis (compile-time const).
    m = np.zeros((Hp, Wp), np.float32)
    m[1:H + 1, 1:W + 1] = 1.0
    mask_np = np.zeros((1, PP), np.float32)
    mask_np[0, :P] = m.reshape(-1)
    mask = jnp.asarray(mask_np)

    kernel = functools.partial(_fam_kernel, wp=Wp)

    out_pad = pl.pallas_call(
        kernel,
        out_shape=jax.ShapeDtypeStruct((N, Cout, PP), jnp.float32),
        grid_spec=pltpu.PrefetchScalarGridSpec(
            num_scalar_prefetch=0,
            grid=(N,),
            in_specs=[
                pl.BlockSpec((1, Cin, PP), lambda n: (n, 0, 0)),
                pl.BlockSpec((Cmid, 9 * Cin), lambda n: (0, 0)),
                pl.BlockSpec((Cmid, 1), lambda n: (0, 0)),
                pl.BlockSpec((Cout, 9 * Cmid), lambda n: (0, 0)),
                pl.BlockSpec((Cout, 1), lambda n: (0, 0)),
                pl.BlockSpec((1, PP), lambda n: (0, 0)),
            ],
            out_specs=pl.BlockSpec((1, Cout, PP), lambda n: (n, 0, 0)),
            scratch_shapes=[
                pltpu.VMEM((9 * Cin, PP), jnp.float32),
                pltpu.VMEM((9 * Cmid, PP), jnp.float32),
            ],
        ),
        compiler_params=pltpu.CompilerParams(
            dimension_semantics=("parallel",)),
    )(x, w1t, b1c, w2t, b2c, mask)

    # (N, Cout, PP) -> interior (N, Cout, H, W): one tiny XLA slice + reshape.
    out = out_pad[:, :, :P].reshape(N, Cout, Hp, Wp)[:, :, 1:H + 1, 1:W + 1]
    return out


def _reference_forward(x1_nchw, x2_nchw, w1, b1, w2, b2):
    """Pure-JAX reference (lax conv) for correctness check."""
    x = jnp.concatenate([x1_nchw, x2_nchw], axis=1)
    x = jnp.transpose(x, (0, 2, 3, 1)).astype(jnp.float32)
    dn = ("NHWC", "HWIO", "NHWC")
    y = jax.lax.conv_general_dilated(x, w1, (1, 1), "SAME", dimension_numbers=dn)
    y = jax.nn.relu(y + b1.reshape(1, 1, 1, -1))
    y = jax.lax.conv_general_dilated(y, w2, (1, 1), "SAME", dimension_numbers=dn)
    y = y + b2.reshape(1, 1, 1, -1)
    return jnp.transpose(y, (0, 3, 1, 2))


if __name__ == "__main__":
    # Module hyper-parameters (small, consistent with the torch module).
    in_channels1, in_channels2, out_channels = 4, 4, 8
    N, H, W = 2, 16, 16
    Cin = in_channels1 + in_channels2

    key = jax.random.PRNGKey(0)
    k1, k2, k3, k4, k5, k6 = jax.random.split(key, 6)

    # Deterministic parameter init (HWIO layout).
    w1 = 0.1 * jax.random.normal(k1, (3, 3, Cin, out_channels), jnp.float32)
    b1 = 0.1 * jax.random.normal(k2, (out_channels,), jnp.float32)
    w2 = 0.1 * jax.random.normal(k3, (3, 3, out_channels, out_channels), jnp.float32)
    b2 = 0.1 * jax.random.normal(k4, (out_channels,), jnp.float32)

    # Inputs (NCHW, like the PyTorch module).
    x1 = jax.random.normal(k5, (N, in_channels1, H, W), jnp.float32)
    x2 = jax.random.normal(k6, (N, in_channels2, H, W), jnp.float32)

    out = jax.block_until_ready(feature_aggregation_forward(x1, x2, w1, b1, w2, b2))
    ref = jax.block_until_ready(_reference_forward(x1, x2, w1, b1, w2, b2))

    # bf16 MXU operands + f32 accumulation -> ~1e-2-level tolerance.
    np.testing.assert_allclose(np.asarray(out), np.asarray(ref), rtol=3e-2, atol=3e-2)
    print("KERNEL_OK")
</pallas_src>

<mosaic_0001>
module attributes {stable_mosaic.version = 11 : i64} {
  func.func @_fam_kernel(%arg0: i32, %arg1: memref<1x8x384xf32, #tpu.memory_space<vmem>>, %arg2: memref<8x72xbf16, #tpu.memory_space<vmem>>, %arg3: memref<8x1xf32, #tpu.memory_space<vmem>>, %arg4: memref<8x72xbf16, #tpu.memory_space<vmem>>, %arg5: memref<8x1xf32, #tpu.memory_space<vmem>>, %arg6: memref<1x384xf32, #tpu.memory_space<vmem>>, %arg7: memref<1x8x384xf32, #tpu.memory_space<vmem>>, %arg8: memref<72x384xf32, #tpu.memory_space<vmem>>, %arg9: memref<72x384xf32, #tpu.memory_space<vmem>>) attributes {dimension_semantics = [#tpu.dimension_semantics<parallel>], iteration_bounds = array<i64: 2>, scalar_prefetch = 0 : i64, scratch_operands = 2 : i64, tpu.core_type = #tpu.core_type<tc>, window_params = [{transform_indices = @transform_0, window_bounds = array<i64: 1, 8, 384>}, {pipeline_mode = #tpu.pipeline_mode<synchronous>, transform_indices = @transform_1, window_bounds = array<i64: 8, 72>}, {pipeline_mode = #tpu.pipeline_mode<synchronous>, transform_indices = @transform_2, window_bounds = array<i64: 8, 1>}, {pipeline_mode = #tpu.pipeline_mode<synchronous>, transform_indices = @transform_3, window_bounds = array<i64: 8, 72>}, {pipeline_mode = #tpu.pipeline_mode<synchronous>, transform_indices = @transform_4, window_bounds = array<i64: 8, 1>}, {pipeline_mode = #tpu.pipeline_mode<synchronous>, transform_indices = @transform_5, window_bounds = array<i64: 1, 384>}, {transform_indices = @transform_6, window_bounds = array<i64: 1, 8, 384>}]} {
    %c0 = arith.constant 0 : index
    %c0_0 = arith.constant 0 : index
    %c0_1 = arith.constant 0 : index
    %0 = vector.load %arg1[%c0, %c0_0, %c0_1] : memref<1x8x384xf32, #tpu.memory_space<vmem>>, vector<1x8x384xf32>
    %1 = vector.shape_cast %0 : vector<1x8x384xf32> to vector<8x384xf32>
    %c19_i32 = arith.constant 19 : i32
    %2 = tpu.dynamic_rotate %1 by %c19_i32 dim 1 : vector<8x384xf32>, i32 -> vector<8x384xf32>
    %c0_2 = arith.constant 0 : index
    %c0_3 = arith.constant 0 : index
    %3 = vector.load %arg8[%c0_2, %c0_3] : memref<72x384xf32, #tpu.memory_space<vmem>>, vector<8x384xf32>
    tpu.vector_store %arg8[%c0_2, %c0_3], %2 {strides = array<i32>} : memref<72x384xf32, #tpu.memory_space<vmem>>, vector<8x384xf32>,
    %c18_i32 = arith.constant 18 : i32
    %4 = tpu.dynamic_rotate %1 by %c18_i32 dim 1 : vector<8x384xf32>, i32 -> vector<8x384xf32>
    %c8 = arith.constant 8 : index
    %c0_4 = arith.constant 0 : index
    %5 = vector.load %arg8[%c8, %c0_4] : memref<72x384xf32, #tpu.memory_space<vmem>>, vector<8x384xf32>
    tpu.vector_store %arg8[%c8, %c0_4], %4 {strides = array<i32>} : memref<72x384xf32, #tpu.memory_space<vmem>>, vector<8x384xf32>,
    %c17_i32 = arith.constant 17 : i32
    %6 = tpu.dynamic_rotate %1 by %c17_i32 dim 1 : vector<8x384xf32>, i32 -> vector<8x384xf32>
    %c16 = arith.constant 16 : index
    %c0_5 = arith.constant 0 : index
    %7 = vector.load %arg8[%c16, %c0_5] : memref<72x384xf32, #tpu.memory_space<vmem>>, vector<8x384xf32>
    tpu.vector_store %arg8[%c16, %c0_5], %6 {strides = array<i32>} : memref<72x384xf32, #tpu.memory_space<vmem>>, vector<8x384xf32>,
    %c1_i32 = arith.constant 1 : i32
    %8 = tpu.dynamic_rotate %1 by %c1_i32 dim 1 : vector<8x384xf32>, i32 -> vector<8x384xf32>
    %c24 = arith.constant 24 : index
    %c0_6 = arith.constant 0 : index
    %9 = vector.load %arg8[%c24, %c0_6] : memref<72x384xf32, #tpu.memory_space<vmem>>, vector<8x384xf32>
    tpu.vector_store %arg8[%c24, %c0_6], %8 {strides = array<i32>} : memref<72x384xf32, #tpu.memory_space<vmem>>, vector<8x384xf32>,
    %c32 = arith.constant 32 : index
    %c0_7 = arith.constant 0 : index
    %10 = vector.load %arg8[%c32, %c0_7] : memref<72x384xf32, #tpu.memory_space<vmem>>, vector<8x384xf32>
    tpu.vector_store %arg8[%c32, %c0_7], %1 {strides = array<i32>} : memref<72x384xf32, #tpu.memory_space<vmem>>, vector<8x384xf32>,
    %c383_i32 = arith.constant 383 : i32
    %11 = tpu.dynamic_rotate %1 by %c383_i32 dim 1 : vector<8x384xf32>, i32 -> vector<8x384xf32>
    %c40 = arith.constant 40 : index
    %c0_8 = arith.constant 0 : index
    %12 = vector.load %arg8[%c40, %c0_8] : memref<72x384xf32, #tpu.memory_space<vmem>>, vector<8x384xf32>
    tpu.vector_store %arg8[%c40, %c0_8], %11 {strides = array<i32>} : memref<72x384xf32, #tpu.memory_space<vmem>>, vector<8x384xf32>,
    %c367_i32 = arith.constant 367 : i32
    %13 = tpu.dynamic_rotate %1 by %c367_i32 dim 1 : vector<8x384xf32>, i32 -> vector<8x384xf32>
    %c48 = arith.constant 48 : index
    %c0_9 = arith.constant 0 : index
    %14 = vector.load %arg8[%c48, %c0_9] : memref<72x384xf32, #tpu.memory_space<vmem>>, vector<8x384xf32>
    tpu.vector_store %arg8[%c48, %c0_9], %13 {strides = array<i32>} : memref<72x384xf32, #tpu.memory_space<vmem>>, vector<8x384xf32>,
    %c366_i32 = arith.constant 366 : i32
    %15 = tpu.dynamic_rotate %1 by %c366_i32 dim 1 : vector<8x384xf32>, i32 -> vector<8x384xf32>
    %c56 = arith.constant 56 : index
    %c0_10 = arith.constant 0 : index
    %16 = vector.load %arg8[%c56, %c0_10] : memref<72x384xf32, #tpu.memory_space<vmem>>, vector<8x384xf32>
    tpu.vector_store %arg8[%c56, %c0_10], %15 {strides = array<i32>} : memref<72x384xf32, #tpu.memory_space<vmem>>, vector<8x384xf32>,
    %c365_i32 = arith.constant 365 : i32
    %17 = tpu.dynamic_rotate %1 by %c365_i32 dim 1 : vector<8x384xf32>, i32 -> vector<8x384xf32>
    %c64 = arith.constant 64 : index
    %c0_11 = arith.constant 0 : index
    %18 = vector.load %arg8[%c64, %c0_11] : memref<72x384xf32, #tpu.memory_space<vmem>>, vector<8x384xf32>
    tpu.vector_store %arg8[%c64, %c0_11], %17 {strides = array<i32>} : memref<72x384xf32, #tpu.memory_space<vmem>>, vector<8x384xf32>,
    %c0_12 = arith.constant 0 : index
    %c0_13 = arith.constant 0 : index
    %19 = vector.load %arg2[%c0_12, %c0_13] : memref<8x72xbf16, #tpu.memory_space<vmem>>, vector<8x72xbf16>
    %c0_14 = arith.constant 0 : index
    %c0_15 = arith.constant 0 : index
    %20 = vector.load %arg8[%c0_14, %c0_15] : memref<72x384xf32, #tpu.memory_space<vmem>>, vector<72x384xf32>
    %21 = arith.truncf %20 : vector<72x384xf32> to vector<72x384xbf16>
    %cst = arith.constant dense<0.000000e+00> : vector<8x384xf32>
    %22 = tpu.matmul %19, %21, %cst {dimension_numbers = #tpu.dot_dimension_numbers<[1], [0], [0], [1], [0, 0, 1, 1], [], []>} : vector<8x72xbf16>, vector<72x384xbf16>, vector<8x384xf32> -> vector<8x384xf32>
    %c0_16 = arith.constant 0 : index
    %c0_17 = arith.constant 0 : index
    %23 = vector.load %arg3[%c0_16, %c0_17] : memref<8x1xf32, #tpu.memory_space<vmem>>, vector<8x1xf32>
    %24 = vector.broadcast %23 : vector<8x1xf32> to vector<8x384xf32>
    %25 = arith.addf %22, %24 : vector<8x384xf32>
    %cst_18 = arith.constant 0.000000e+00 : f32
    %26 = vector.broadcast %cst_18 : f32 to vector<8x384xf32>
    %27 = arith.maximumf %25, %26 : vector<8x384xf32>
    %c0_19 = arith.constant 0 : index
    %c0_20 = arith.constant 0 : index
    %28 = vector.load %arg6[%c0_19, %c0_20] : memref<1x384xf32, #tpu.memory_space<vmem>>, vector<1x384xf32>
    %29 = vector.broadcast %28 : vector<1x384xf32> to vector<8x384xf32>
    %30 = arith.mulf %27, %29 : vector<8x384xf32>
    %c19_i32_21 = arith.constant 19 : i32
    %31 = tpu.dynamic_rotate %30 by %c19_i32_21 dim 1 : vector<8x384xf32>, i32 -> vector<8x384xf32>
    %c0_22 = arith.constant 0 : index
    %c0_23 = arith.constant 0 : index
    %32 = vector.load %arg9[%c0_22, %c0_23] : memref<72x384xf32, #tpu.memory_space<vmem>>, vector<8x384xf32>
    tpu.vector_store %arg9[%c0_22, %c0_23], %31 {strides = array<i32>} : memref<72x384xf32, #tpu.memory_space<vmem>>, vector<8x384xf32>,
    %c18_i32_24 = arith.constant 18 : i32
    %33 = tpu.dynamic_rotate %30 by %c18_i32_24 dim 1 : vector<8x384xf32>, i32 -> vector<8x384xf32>
    %c8_25 = arith.constant 8 : index
    %c0_26 = arith.constant 0 : index
    %34 = vector.load %arg9[%c8_25, %c0_26] : memref<72x384xf32, #tpu.memory_space<vmem>>, vector<8x384xf32>
    tpu.vector_store %arg9[%c8_25, %c0_26], %33 {strides = array<i32>} : memref<72x384xf32, #tpu.memory_space<vmem>>, vector<8x384xf32>,
    %c17_i32_27 = arith.constant 17 : i32
    %35 = tpu.dynamic_rotate %30 by %c17_i32_27 dim 1 : vector<8x384xf32>, i32 -> vector<8x384xf32>
    %c16_28 = arith.constant 16 : index
    %c0_29 = arith.constant 0 : index
    %36 = vector.load %arg9[%c16_28, %c0_29] : memref<72x384xf32, #tpu.memory_space<vmem>>, vector<8x384xf32>
    tpu.vector_store %arg9[%c16_28, %c0_29], %35 {strides = array<i32>} : memref<72x384xf32, #tpu.memory_space<vmem>>, vector<8x384xf32>,
    %c1_i32_30 = arith.constant 1 : i32
    %37 = tpu.dynamic_rotate %30 by %c1_i32_30 dim 1 : vector<8x384xf32>, i32 -> vector<8x384xf32>
    %c24_31 = arith.constant 24 : index
    %c0_32 = arith.constant 0 : index
    %38 = vector.load %arg9[%c24_31, %c0_32] : memref<72x384xf32, #tpu.memory_space<vmem>>, vector<8x384xf32>
    tpu.vector_store %arg9[%c24_31, %c0_32], %37 {strides = array<i32>} : memref<72x384xf32, #tpu.memory_space<vmem>>, vector<8x384xf32>,
    %c32_33 = arith.constant 32 : index
    %c0_34 = arith.constant 0 : index
    %39 = vector.load %arg9[%c32_33, %c0_34] : memref<72x384xf32, #tpu.memory_space<vmem>>, vector<8x384xf32>
    tpu.vector_store %arg9[%c32_33, %c0_34], %30 {strides = array<i32>} : memref<72x384xf32, #tpu.memory_space<vmem>>, vector<8x384xf32>,
    %c383_i32_35 = arith.constant 383 : i32
    %40 = tpu.dynamic_rotate %30 by %c383_i32_35 dim 1 : vector<8x384xf32>, i32 -> vector<8x384xf32>
    %c40_36 = arith.constant 40 : index
    %c0_37 = arith.constant 0 : index
    %41 = vector.load %arg9[%c40_36, %c0_37] : memref<72x384xf32, #tpu.memory_space<vmem>>, vector<8x384xf32>
    tpu.vector_store %arg9[%c40_36, %c0_37], %40 {strides = array<i32>} : memref<72x384xf32, #tpu.memory_space<vmem>>, vector<8x384xf32>,
    %c367_i32_38 = arith.constant 367 : i32
    %42 = tpu.dynamic_rotate %30 by %c367_i32_38 dim 1 : vector<8x384xf32>, i32 -> vector<8x384xf32>
    %c48_39 = arith.constant 48 : index
    %c0_40 = arith.constant 0 : index
    %43 = vector.load %arg9[%c48_39, %c0_40] : memref<72x384xf32, #tpu.memory_space<vmem>>, vector<8x384xf32>
    tpu.vector_store %arg9[%c48_39, %c0_40], %42 {strides = array<i32>} : memref<72x384xf32, #tpu.memory_space<vmem>>, vector<8x384xf32>,
    %c366_i32_41 = arith.constant 366 : i32
    %44 = tpu.dynamic_rotate %30 by %c366_i32_41 dim 1 : vector<8x384xf32>, i32 -> vector<8x384xf32>
    %c56_42 = arith.constant 56 : index
    %c0_43 = arith.constant 0 : index
    %45 = vector.load %arg9[%c56_42, %c0_43] : memref<72x384xf32, #tpu.memory_space<vmem>>, vector<8x384xf32>
    tpu.vector_store %arg9[%c56_42, %c0_43], %44 {strides = array<i32>} : memref<72x384xf32, #tpu.memory_space<vmem>>, vector<8x384xf32>,
    %c365_i32_44 = arith.constant 365 : i32
    %46 = tpu.dynamic_rotate %30 by %c365_i32_44 dim 1 : vector<8x384xf32>, i32 -> vector<8x384xf32>
    %c64_45 = arith.constant 64 : index
    %c0_46 = arith.constant 0 : index
    %47 = vector.load %arg9[%c64_45, %c0_46] : memref<72x384xf32, #tpu.memory_space<vmem>>, vector<8x384xf32>
    tpu.vector_store %arg9[%c64_45, %c0_46], %46 {strides = array<i32>} : memref<72x384xf32, #tpu.memory_space<vmem>>, vector<8x384xf32>,
    %c0_47 = arith.constant 0 : index
    %c0_48 = arith.constant 0 : index
    %48 = vector.load %arg4[%c0_47, %c0_48] : memref<8x72xbf16, #tpu.memory_space<vmem>>, vector<8x72xbf16>
    %c0_49 = arith.constant 0 : index
    %c0_50 = arith.constant 0 : index
    %49 = vector.load %arg9[%c0_49, %c0_50] : memref<72x384xf32, #tpu.memory_space<vmem>>, vector<72x384xf32>
    %50 = arith.truncf %49 : vector<72x384xf32> to vector<72x384xbf16>
    %cst_51 = arith.constant dense<0.000000e+00> : vector<8x384xf32>
    %51 = tpu.matmul %48, %50, %cst_51 {dimension_numbers = #tpu.dot_dimension_numbers<[1], [0], [0], [1], [0, 0, 1, 1], [], []>} : vector<8x72xbf16>, vector<72x384xbf16>, vector<8x384xf32> -> vector<8x384xf32>
    %c0_52 = arith.constant 0 : index
    %c0_53 = arith.constant 0 : index
    %52 = vector.load %arg5[%c0_52, %c0_53] : memref<8x1xf32, #tpu.memory_space<vmem>>, vector<8x1xf32>
    %53 = vector.broadcast %52 : vector<8x1xf32> to vector<8x384xf32>
    %54 = arith.addf %51, %53 : vector<8x384xf32>
    %c0_54 = arith.constant 0 : index
    %c0_55 = arith.constant 0 : index
    %c0_56 = arith.constant 0 : index
    %55 = vector.load %arg7[%c0_54, %c0_55, %c0_56] : memref<1x8x384xf32, #tpu.memory_space<vmem>>, vector<1x8x384xf32>
    %56 = vector.shape_cast %55 : vector<1x8x384xf32> to vector<8x384xf32>
    %57 = vector.shape_cast %54 : vector<8x384xf32> to vector<1x8x384xf32>
    tpu.vector_store %arg7[%c0_54, %c0_55, %c0_56], %57 {strides = array<i32>} : memref<1x8x384xf32, #tpu.memory_space<vmem>>, vector<1x8x384xf32>,
    return
  }
  func.func @transform_0(%arg0: i32) -> (i32, i32, i32) {
    %c0_i32 = arith.constant 0 : i32
    %c0_i32_0 = arith.constant 0 : i32
    %c0_i32_1 = arith.constant 0 : i32
    return %arg0, %c0_i32, %c0_i32_0 : i32, i32, i32
  }
  func.func @transform_1(%arg0: i32) -> (i32, i32) {
    %c0_i32 = arith.constant 0 : i32
    %c0_i32_0 = arith.constant 0 : i32
    %c0_i32_1 = arith.constant 0 : i32
    return %c0_i32, %c0_i32_0 : i32, i32
  }
  func.func @transform_2(%arg0: i32) -> (i32, i32) {
    %c0_i32 = arith.constant 0 : i32
    %c0_i32_0 = arith.constant 0 : i32
    %c0_i32_1 = arith.constant 0 : i32
    return %c0_i32, %c0_i32_0 : i32, i32
  }
  func.func @transform_3(%arg0: i32) -> (i32, i32) {
    %c0_i32 = arith.constant 0 : i32
    %c0_i32_0 = arith.constant 0 : i32
    %c0_i32_1 = arith.constant 0 : i32
    return %c0_i32, %c0_i32_0 : i32, i32
  }
  func.func @transform_4(%arg0: i32) -> (i32, i32) {
    %c0_i32 = arith.constant 0 : i32
    %c0_i32_0 = arith.constant 0 : i32
    %c0_i32_1 = arith.constant 0 : i32
    return %c0_i32, %c0_i32_0 : i32, i32
  }
  func.func @transform_5(%arg0: i32) -> (i32, i32) {
    %c0_i32 = arith.constant 0 : i32
    %c0_i32_0 = arith.constant 0 : i32
    %c0_i32_1 = arith.constant 0 : i32
    return %c0_i32, %c0_i32_0 : i32, i32
  }
  func.func @transform_6(%arg0: i32) -> (i32, i32, i32) {
    %c0_i32 = arith.constant 0 : i32
    %c0_i32_0 = arith.constant 0 : i32
    %c0_i32_1 = arith.constant 0 : i32
    return %arg0, %c0_i32, %c0_i32_0 : i32, i32, i32
  }
}

</mosaic_0001>

<llo_original>
// kernel: feature_aggregation_forward.1
$region0: #{feature_aggregation_forward.1}
  #allocation0 [shape = 'u32[]', space=smem, size = 0x4, offset = 0x4, fixed_abs, tag = 'smem constant byte address 0x4 - core index']
  #allocation1 [shape = 'u32[144,128]{1,0:T(1,128)}', space=vmem, size = 0x12000, scoped, tag = 'internal scratch']
  #allocation2 [shape = 'f32[72,384]{1,0:T(8,128)}', space=vmem, size = 0x1b000, scoped, tag = 'scratch operand']
  #allocation3 [shape = 'f32[72,384]{1,0:T(8,128)}', space=vmem, size = 0x1b000, scoped, tag = 'scratch operand']
  %s0 = inlined_call_operand.vmem [shape: f32[2,8,384], index: 0, kind: input, shape index: {}]
  %s1 = inlined_call_operand.vmem [shape: bf16[8,72], index: 1, kind: input, shape index: {}]
  %s2 = inlined_call_operand.vmem [shape: f32[8,1], index: 2, kind: input, shape index: {}]
  %s3 = inlined_call_operand.vmem [shape: bf16[8,72], index: 3, kind: input, shape index: {}]
  %s4 = inlined_call_operand.vmem [shape: f32[8,1], index: 4, kind: input, shape index: {}]
  %s5 = inlined_call_operand.vmem [shape: f32[1,384], index: 5, kind: input, shape index: {}]
  %s6 = inlined_call_operand.vmem [shape: f32[2,8,384], index: 6, kind: output, shape index: {}]
  %s7 = sld [smem:[#allocation0]]
  $region57: #{feature_aggregation_forward.1} parent=0
    _
  %s9 = ssub.s32 1, %s7
  %s10 = scalar_select 0, %s9, %s7
  loop: start=0, step=1, limit=4
  $region2: #{feature_aggregation_forward.1} parent=0 // loop_pre_header
    _
  $region3: #{feature_aggregation_forward.1} parent=0 // loop_header
    %s12 = sphi 0, %s16
    %p13 = scmp.ge.s32.totalorder %s12, 4
    %s22 = sphi 0, %s24
    %s25 = sphi 0, %s22
    %s26 = sphi 0, %s25
    %s42 = sphi 0, %s26
    %s46 = sphi 0, %s46
    %s48 = sphi 0, %s46
    %s49 = sphi 0, %s48
    %s63 = sphi 0, %s49
    %s67 = sphi 0, %s67
    %s69 = sphi 0, %s67
    %s70 = sphi 0, %s69
    %s84 = sphi 0, %s70
    %s88 = sphi 0, %s88
    %s90 = sphi 0, %s88
    %s91 = sphi 0, %s90
    %s105 = sphi 0, %s91
    %s109 = sphi 0, %s109
    %s111 = sphi 0, %s109
    %s112 = sphi 0, %s111
    %s126 = sphi 0, %s112
    %s130 = sphi 0, %s130
    %s132 = sphi 0, %s130
    %s133 = sphi 0, %s132
    %s147 = sphi 0, %s133
    %s153 = sphi 0, %s155
    %s156 = sphi 0, %s153
    %s157 = sphi 0, %s156
    %s173 = sphi 0, %s157
  $region4: #{feature_aggregation_forward.1} parent=0 // loop_header_branch
    %15 = sbr.rel (%p13) target = $region8
  $region5: #{feature_aggregation_forward.1} parent=0 // loop_body
    %s17 = ssub.s32 %s12, 1
    %s18 = ssub.s32 %s12, 2
    %s19 = sadd.s32 %s12, 1
    %s20 = ssub.s32 %s12, %s19
    %p21 = scmp.eq.s32.totalorder %s20, 0
    %s23 = sadd.s32 %s22, 1
    %s24 = scalar_select %p21, %s22, %s23
    %p27 = pneg %p21
    %p28 = scmp.eq.s32.totalorder %s12, 1
    %p29 = por %p27, %p28
    %p30 = scmp.ne.s32.totalorder %s22, %s25
    %p31 = scmp.eq.s32.totalorder %s12, 0
    %p32 = por %p30, %p31
    %p33 = scmp.ne.s32.totalorder %s22, %s25
    %p34 = scmp.eq.s32.totalorder %s17, 1
    %p35 = por %p33, %p34
    %p36 = scmp.ne.s32.totalorder %s25, %s26
    %p37 = scmp.eq.s32.totalorder %s17, 0
    %p38 = por %p36, %p37
    %p39 = scmp.ne.s32.totalorder %s25, %s26
    %p40 = scmp.eq.s32.totalorder %s18, 1
    %p41 = por %p39, %p40
    %p43 = scmp.ne.s32.totalorder %s26, %s42
    %p44 = scmp.eq.s32.totalorder %s18, 0
    %p45 = por %p43, %p44
    %s47 = sadd.s32 %s46, 1
    %p50 = scmp.eq.s32.totalorder %s12, 1
    %p51 = scmp.ne.s32.totalorder %s46, %s48
    %p52 = scmp.eq.s32.totalorder %s12, 0
    %p53 = por %p51, %p52
    %p54 = scmp.ne.s32.totalorder %s46, %s48
    %p55 = scmp.eq.s32.totalorder %s17, 1
    %p56 = por %p54, %p55
    %p57 = scmp.ne.s32.totalorder %s48, %s49
    %p58 = scmp.eq.s32.totalorder %s17, 0
    %p59 = por %p57, %p58
    %p60 = scmp.ne.s32.totalorder %s48, %s49
    %p61 = scmp.eq.s32.totalorder %s18, 1
    %p62 = por %p60, %p61
    %p64 = scmp.ne.s32.totalorder %s49, %s63
    %p65 = scmp.eq.s32.totalorder %s18, 0
    %p66 = por %p64, %p65
    %s68 = sadd.s32 %s67, 1
    %p71 = scmp.eq.s32.totalorder %s12, 1
    %p72 = scmp.ne.s32.totalorder %s67, %s69
    %p73 = scmp.eq.s32.totalorder %s12, 0
    %p74 = por %p72, %p73
    %p75 = scmp.ne.s32.totalorder %s67, %s69
    %p76 = scmp.eq.s32.totalorder %s17, 1
    %p77 = por %p75, %p76
    %p78 = scmp.ne.s32.totalorder %s69, %s70
    %p79 = scmp.eq.s32.totalorder %s17, 0
    %p80 = por %p78, %p79
    %p81 = scmp.ne.s32.totalorder %s69, %s70
    %p82 = scmp.eq.s32.totalorder %s18, 1
    %p83 = por %p81, %p82
    %p85 = scmp.ne.s32.totalorder %s70, %s84
    %p86 = scmp.eq.s32.totalorder %s18, 0
    %p87 = por %p85, %p86
    %s89 = sadd.s32 %s88, 1
    %p92 = scmp.eq.s32.totalorder %s12, 1
    %p93 = scmp.ne.s32.totalorder %s88, %s90
    %p94 = scmp.eq.s32.totalorder %s12, 0
    %p95 = por %p93, %p94
    %p96 = scmp.ne.s32.totalorder %s88, %s90
    %p97 = scmp.eq.s32.totalorder %s17, 1
    %p98 = por %p96, %p97
    %p99 = scmp.ne.s32.totalorder %s90, %s91
    %p100 = scmp.eq.s32.totalorder %s17, 0
    %p101 = por %p99, %p100
    %p102 = scmp.ne.s32.totalorder %s90, %s91
    %p103 = scmp.eq.s32.totalorder %s18, 1
    %p104 = por %p102, %p103
    %p106 = scmp.ne.s32.totalorder %s91, %s105
    %p107 = scmp.eq.s32.totalorder %s18, 0
    %p108 = por %p106, %p107
    %s110 = sadd.s32 %s109, 1
    %p113 = scmp.eq.s32.totalorder %s12, 1
    %p114 = scmp.ne.s32.totalorder %s109, %s111
    %p115 = scmp.eq.s32.totalorder %s12, 0
    %p116 = por %p114, %p115
    %p117 = scmp.ne.s32.totalorder %s109, %s111
    %p118 = scmp.eq.s32.totalorder %s17, 1
    %p119 = por %p117, %p118
    %p120 = scmp.ne.s32.totalorder %s111, %s112
    %p121 = scmp.eq.s32.totalorder %s17, 0
    %p122 = por %p120, %p121
    %p123 = scmp.ne.s32.totalorder %s111, %s112
    %p124 = scmp.eq.s32.totalorder %s18, 1
    %p125 = por %p123, %p124
    %p127 = scmp.ne.s32.totalorder %s112, %s126
    %p128 = scmp.eq.s32.totalorder %s18, 0
    %p129 = por %p127, %p128
    %s131 = sadd.s32 %s130, 1
    %p134 = scmp.eq.s32.totalorder %s12, 1
    %p135 = scmp.ne.s32.totalorder %s130, %s132
    %p136 = scmp.eq.s32.totalorder %s12, 0
    %p137 = por %p135, %p136
    %p138 = scmp.ne.s32.totalorder %s130, %s132
    %p139 = scmp.eq.s32.totalorder %s17, 1
    %p140 = por %p138, %p139
    %p141 = scmp.ne.s32.totalorder %s132, %s133
    %p142 = scmp.eq.s32.totalorder %s17, 0
    %p143 = por %p141, %p142
    %p144 = scmp.ne.s32.totalorder %s132, %s133
    %p145 = scmp.eq.s32.totalorder %s18, 1
    %p146 = por %p144, %p145
    %p148 = scmp.ne.s32.totalorder %s133, %s147
    %p149 = scmp.eq.s32.totalorder %s18, 0
    %p150 = por %p148, %p149
    %s151 = ssub.s32 %s12, %s19
    %p152 = scmp.eq.s32.totalorder %s151, 0
    %s154 = sadd.s32 %s153, 1
    %s155 = scalar_select %p152, %s153, %s154
    %p158 = pneg %p152
    %p159 = scmp.eq.s32.totalorder %s12, 1
    %p160 = por %p158, %p159
    %p161 = scmp.ne.s32.totalorder %s153, %s156
    %p162 = scmp.eq.s32.totalorder %s12, 0
    %p163 = por %p161, %p162
    %p164 = scmp.ne.s32.totalorder %s153, %s156
    %p165 = scmp.eq.s32.totalorder %s17, 1
    %p166 = por %p164, %p165
    %p167 = scmp.ne.s32.totalorder %s156, %s157
    %p168 = scmp.eq.s32.totalorder %s17, 0
    %p169 = por %p167, %p168
    %p170 = scmp.ne.s32.totalorder %s156, %s157
    %p171 = scmp.eq.s32.totalorder %s18, 1
    %p172 = por %p170, %p171
    %p174 = scmp.ne.s32.totalorder %s157, %s173
    %p175 = scmp.eq.s32.totalorder %s18, 0
    %p176 = por %p174, %p175
    %p177 = scmp.le.s32.totalorder 1, %s12
    %p178 = scmp.lt.s32.totalorder %s12, 3
    %p179 = pnand %p177, %p178
    %p180 = pneg %p179
    // Predicated region
    $region9: #{feature_aggregation_forward.1} parent=5 // pred_check
      _
    $region10: #{feature_aggregation_forward.1} parent=5 // pred_check_branch
      %182 = sbr.rel (%p179) target = $region12
    $region11: #{feature_aggregation_forward.1} parent=5 // pred_region
      %s183 = ssub.s32 %s12, 1
      // Predicated region
      $region13: #{feature_aggregation_forward.1} parent=11 // pred_check
        %p184 = pneg %p59
      $region14: #{feature_aggregation_forward.1} parent=11 // pred_check_branch
        %186 = sbr.rel (%p184) target = $region16
      $region15: #{feature_aggregation_forward.1} parent=11 // pred_region
        _
      $region16: #{feature_aggregation_forward.1} parent=11 // pred_fallthru
        _
      // Predicated region
      $region17: #{feature_aggregation_forward.1} parent=11 // pred_check
        %p187 = pneg %p80
      $region18: #{feature_aggregation_forward.1} parent=11 // pred_check_branch
        %189 = sbr.rel (%p187) target = $region20
      $region19: #{feature_aggregation_forward.1} parent=11 // pred_region
        _
      $region20: #{feature_aggregation_forward.1} parent=11 // pred_fallthru
        _
      // Predicated region
      $region21: #{feature_aggregation_forward.1} parent=11 // pred_check
        %p190 = pneg %p101
      $region22: #{feature_aggregation_forward.1} parent=11 // pred_check_branch
        %192 = sbr.rel (%p190) target = $region24
      $region23: #{feature_aggregation_forward.1} parent=11 // pred_region
        _
      $region24: #{feature_aggregation_forward.1} parent=11 // pred_fallthru
        _
      // Predicated region
      $region25: #{feature_aggregation_forward.1} parent=11 // pred_check
        %p193 = pneg %p122
      $region26: #{feature_aggregation_forward.1} parent=11 // pred_check_branch
        %195 = sbr.rel (%p193) target = $region28
      $region27: #{feature_aggregation_forward.1} parent=11 // pred_region
        _
      $region28: #{feature_aggregation_forward.1} parent=11 // pred_fallthru
        _
      // Predicated region
      $region29: #{feature_aggregation_forward.1} parent=11 // pred_check
        %p196 = pneg %p143
      $region30: #{feature_aggregation_forward.1} parent=11 // pred_check_branch
        %198 = sbr.rel (%p196) target = $region32
      $region31: #{feature_aggregation_forward.1} parent=11 // pred_region
        _
      $region32: #{feature_aggregation_forward.1} parent=11 // pred_fallthru
        _
    $region12: #{feature_aggregation_forward.1} parent=5 // pred_fallthru
      _
    %p199 = scmp.lt.s32.totalorder %s12, 2
    // Predicated region
    $region33: #{feature_aggregation_forward.1} parent=5 // pred_check
      %p200 = pneg %p199
    $region34: #{feature_aggregation_forward.1} parent=5 // pred_check_branch
      %202 = sbr.rel (%p200) target = $region36
    $region35: #{feature_aggregation_forward.1} parent=5 // pred_region
      // Predicated region
      $region37: #{feature_aggregation_forward.1} parent=35 // pred_check
        %p203 = pneg %p32
      $region38: #{feature_aggregation_forward.1} parent=35 // pred_check_branch
        %205 = sbr.rel (%p203) target = $region40
      $region39: #{feature_aggregation_forward.1} parent=35 // pred_region
        %p206 = scmp.lt.s32.totalorder %s12, 1
        %s207 = scalar_select %p206, %s12, 1
        %s208 = smul.addr %s207, 3
        %s209 = smul.addr %s208, 8
        %s210 = scalar_lea.vmem %s0, %s209
      $region40: #{feature_aggregation_forward.1} parent=35 // pred_fallthru
        _
    $region36: #{feature_aggregation_forward.1} parent=5 // pred_fallthru
      _
    %p211 = scmp.le.s32.totalorder 1, %s12
    %p212 = scmp.lt.s32.totalorder %s12, 3
    %p213 = pnand %p211, %p212
    %p214 = pneg %p213
    // Predicated region
    $region41: #{feature_aggregation_forward.1} parent=5 // pred_check
      _
    $region42: #{feature_aggregation_forward.1} parent=5 // pred_check_branch
      %216 = sbr.rel (%p213) target = $region44
    $region43: #{feature_aggregation_forward.1} parent=5 // pred_region
      %s217 = ssub.s32 %s12, 1
      %p218 = scmp.lt.s32.totalorder %s17, 1
      %s219 = scalar_select %p218, %s17, 1
      %s220 = smul.addr %s219, 3
      %s221 = smul.addr %s220, 8
      %s222 = scalar_lea.vmem %s0, %s221
      %p223 = pneg %p38
      %p224 = pneg %p35
      %p225 = pneg %p59
      %p226 = pneg %p56
      %p227 = pneg %p80
      %p228 = pneg %p77
      %p229 = pneg %p101
      %p230 = pneg %p98
      %p231 = pneg %p122
      %p232 = pneg %p119
      %p233 = pneg %p143
      %p234 = pneg %p140
      %p235 = pneg %p169
      %p236 = pneg %p166
      %p237 = scmp.lt.s32.totalorder %s17, 1
      %s238 = scalar_select %p237, %s17, 1
      %s239 = smul.addr %s238, 3
      %s240 = smul.addr %s239, 8
      %s241 = scalar_lea.vmem %s6, %s240
      %p242 = scmp.lt.s32.totalorder %s17, 1
      %s243 = scalar_select %p242, %s17, 1
      %s244 = smul.addr %s243, 3
      %s245 = smul.addr %s244, 8
      %s246 = scalar_lea.vmem %s0, %s245
      %p247 = scmp.lt.s32.totalorder %s17, 1
      %s248 = scalar_select %p247, %s17, 1
      %s249 = smul.addr %s248, 3
      %s250 = smul.addr %s249, 8
      %s251 = scalar_lea.vmem %s6, %s250
      %v253 = vld [vmem:[%s246] sm:$0xff]
      %v254 = vld [vmem:[%s246 + $0x8] sm:$0xff]
      %v255 = vld [vmem:[%s246 + $0x10] sm:$0xff]
      %256 = vrot.lane.b32.xlu0 %v253, 19
      %v257 = vpop.permute.xlu0 %256
      %258 = vrot.lane.b32.xlu0 %v254, 19
      %v259 = vpop.permute.xlu0 %258
      %260 = vrot.lane.b32.xlu0 %v255, 19
      %v261 = vpop.permute.xlu0 %260
      %v262 = vlaneseq
      %v263 = vand.u32 %v262, 127
      %vm264 = vcmp.lt.s32.totalorder %v263, 19
      %v265 = vsel %vm264, %v259, %v261
      %v266 = vsel %vm264, %v257, %v259
      %v267 = vsel %vm264, %v261, %v257
      %268 = vst [vmem:[#allocation2] sm:$0xff] %v267
      %269 = vst [vmem:[#allocation2 + $0x8] sm:$0xff] %v266
      %270 = vst [vmem:[#allocation2 + $0x10] sm:$0xff] %v265
      %271 = vrot.lane.b32.xlu0 %v253, 18
      %v272 = vpop.permute.xlu0 %271
      %273 = vrot.lane.b32.xlu0 %v254, 18
      %v274 = vpop.permute.xlu0 %273
      %275 = vrot.lane.b32.xlu0 %v255, 18
      %v276 = vpop.permute.xlu0 %275
      %vm277 = vcmp.lt.s32.totalorder %v263, 18
      %v278 = vsel %vm277, %v274, %v276
      %v279 = vsel %vm277, %v272, %v274
      %v280 = vsel %vm277, %v276, %v272
      %281 = vst [vmem:[#allocation2 + $0x18] sm:$0xff] %v280
      %282 = vst [vmem:[#allocation2 + $0x20] sm:$0xff] %v279
      %283 = vst [vmem:[#allocation2 + $0x28] sm:$0xff] %v278
      %284 = vrot.lane.b32.xlu0 %v253, 17
      %v285 = vpop.permute.xlu0 %284
      %286 = vrot.lane.b32.xlu0 %v254, 17
      %v287 = vpop.permute.xlu0 %286
      %288 = vrot.lane.b32.xlu0 %v255, 17
      %v289 = vpop.permute.xlu0 %288
      %vm290 = vcmp.lt.s32.totalorder %v263, 17
      %v291 = vsel %vm290, %v287, %v289
      %v292 = vsel %vm290, %v285, %v287
      %v293 = vsel %vm290, %v289, %v285
      %294 = vst [vmem:[#allocation2 + $0x30] sm:$0xff] %v293
      %295 = vst [vmem:[#allocation2 + $0x38] sm:$0xff] %v292
      %296 = vst [vmem:[#allocation2 + $0x40] sm:$0xff] %v291
      %297 = vrot.lane.b32.xlu0 %v253, 1
      %v298 = vpop.permute.xlu0 %297
      %299 = vrot.lane.b32.xlu0 %v254, 1
      %v300 = vpop.permute.xlu0 %299
      %301 = vrot.lane.b32.xlu0 %v255, 1
      %v302 = vpop.permute.xlu0 %301
      %vm303 = vcmp.lt.s32.totalorder %v263, 1
      %v304 = vsel %vm303, %v300, %v302
      %v305 = vsel %vm303, %v298, %v300
      %v306 = vsel %vm303, %v302, %v298
      %307 = vst [vmem:[#allocation2 + $0x48] sm:$0xff] %v306
      %308 = vst [vmem:[#allocation2 + $0x50] sm:$0xff] %v305
      %309 = vst [vmem:[#allocation2 + $0x58] sm:$0xff] %v304
      %310 = vst [vmem:[#allocation2 + $0x60] sm:$0xff] %v253
      %311 = vst [vmem:[#allocation2 + $0x68] sm:$0xff] %v254
      %312 = vst [vmem:[#allocation2 + $0x70] sm:$0xff] %v255
      %313 = vrot.lane.b32.xlu0 %v253, 127
      %v314 = vpop.permute.xlu0 %313
      %315 = vrot.lane.b32.xlu0 %v254, 127
      %v316 = vpop.permute.xlu0 %315
      %317 = vrot.lane.b32.xlu0 %v255, 127
      %v318 = vpop.permute.xlu0 %317
      %vm319 = vcmp.lt.s32.totalorder %v263, 127
      %v320 = vsel %vm319, %v316, %v318
      %v321 = vsel %vm319, %v314, %v316
      %v322 = vsel %vm319, %v318, %v314
      %323 = vst [vmem:[#allocation2 + $0x78] sm:$0xff] %v321
      %324 = vst [vmem:[#allocation2 + $0x80] sm:$0xff] %v320
      %325 = vst [vmem:[#allocation2 + $0x88] sm:$0xff] %v322
      %326 = vrot.lane.b32.xlu0 %v253, 111
      %v327 = vpop.permute.xlu0 %326
      %328 = vrot.lane.b32.xlu0 %v254, 111
      %v329 = vpop.permute.xlu0 %328
      %330 = vrot.lane.b32.xlu0 %v255, 111
      %v331 = vpop.permute.xlu0 %330
      %vm332 = vcmp.lt.s32.totalorder %v263, 111
      %v333 = vsel %vm332, %v329, %v331
      %v334 = vsel %vm332, %v327, %v329
      %v335 = vsel %vm332, %v331, %v327
      %336 = vst [vmem:[#allocation2 + $0x90] sm:$0xff] %v334
      %337 = vst [vmem:[#allocation2 + $0x98] sm:$0xff] %v333
      %338 = vst [vmem:[#allocation2 + $0xa0] sm:$0xff] %v335
      %339 = vrot.lane.b32.xlu0 %v253, 110
      %v340 = vpop.permute.xlu0 %339
      %341 = vrot.lane.b32.xlu0 %v254, 110
      %v342 = vpop.permute.xlu0 %341
      %343 = vrot.lane.b32.xlu0 %v255, 110
      %v344 = vpop.permute.xlu0 %343
      %vm345 = vcmp.lt.s32.totalorder %v263, 110
      %v346 = vsel %vm345, %v342, %v344
      %v347 = vsel %vm345, %v340, %v342
      %v348 = vsel %vm345, %v344, %v340
      %349 = vst [vmem:[#allocation2 + $0xa8] sm:$0xff] %v347
      %350 = vst [vmem:[#allocation2 + $0xb0] sm:$0xff] %v346
      %351 = vst [vmem:[#allocation2 + $0xb8] sm:$0xff] %v348
      %352 = vrot.lane.b32.xlu0 %v253, 109
      %v353 = vpop.permute.xlu0 %352
      %354 = vrot.lane.b32.xlu0 %v254, 109
      %v355 = vpop.permute.xlu0 %354
      %356 = vrot.lane.b32.xlu0 %v255, 109
      %v357 = vpop.permute.xlu0 %356
      %vm358 = vcmp.lt.s32.totalorder %v263, 109
      %v359 = vsel %vm358, %v355, %v357
      %v360 = vsel %vm358, %v353, %v355
      %v361 = vsel %vm358, %v357, %v353
      %362 = vst [vmem:[#allocation2 + $0xc0] sm:$0xff] %v360
      %363 = vst [vmem:[#allocation2 + $0xc8] sm:$0xff] %v359
      %364 = vst [vmem:[#allocation2 + $0xd0] sm:$0xff] %v361
      %v365 = vld [vmem:[%s1] sm:$0xf]
      %v366 = vld [vmem:[#allocation2] sm:$0xff]
      %v367 = vld [vmem:[#allocation2 + $0x8] sm:$0xff]
      %v368 = vld [vmem:[#allocation2 + $0x10] sm:$0xff]
      %v369 = vld [vmem:[#allocation2 + $0x18] sm:$0xff]
      %v370 = vld [vmem:[#allocation2 + $0x20] sm:$0xff]
      %v371 = vld [vmem:[#allocation2 + $0x28] sm:$0xff]
      %v372 = vld [vmem:[#allocation2 + $0x30] sm:$0xff]
      %v373 = vld [vmem:[#allocation2 + $0x38] sm:$0xff]
      %v374 = vld [vmem:[#allocation2 + $0x40] sm:$0xff]
      %v375 = vld [vmem:[#allocation2 + $0x48] sm:$0xff]
      %v376 = vld [vmem:[#allocation2 + $0x50] sm:$0xff]
      %v377 = vld [vmem:[#allocation2 + $0x58] sm:$0xff]
      %v378 = vld [vmem:[#allocation2 + $0x60] sm:$0xff]
      %v379 = vld [vmem:[#allocation2 + $0x68] sm:$0xff]
      %v380 = vld [vmem:[#allocation2 + $0x70] sm:$0xff]
      %v381 = vld [vmem:[#allocation2 + $0x78] sm:$0xff]
      %v382 = vld [vmem:[#allocation2 + $0x80] sm:$0xff]
      %v383 = vld [vmem:[#allocation2 + $0x88] sm:$0xff]
      %v384 = vld [vmem:[#allocation2 + $0x90] sm:$0xff]
      %v385 = vld [vmem:[#allocation2 + $0x98] sm:$0xff]
      %v386 = vld [vmem:[#allocation2 + $0xa0] sm:$0xff]
      %v387 = vld [vmem:[#allocation2 + $0xa8] sm:$0xff]
      %v388 = vld [vmem:[#allocation2 + $0xb0] sm:$0xff]
      %v389 = vld [vmem:[#allocation2 + $0xb8] sm:$0xff]
      %v390 = vld [vmem:[#allocation2 + $0xc0] sm:$0xff]
      %v391 = vld [vmem:[#allocation2 + $0xc8] sm:$0xff]
      %v392 = vld [vmem:[#allocation2 + $0xd0] sm:$0xff]
      %v393 = vpack.c.bf16 %v369, %v366
      %v394 = vpack.c.bf16 %v370, %v367
      %v395 = vpack.c.bf16 %v371, %v368
      %v396 = vpack.c.bf16 %v375, %v372
      %v397 = vpack.c.bf16 %v376, %v373
      %v398 = vpack.c.bf16 %v377, %v374
      %v399 = vpack.c.bf16 %v381, %v378
      %v400 = vpack.c.bf16 %v382, %v379
      %v401 = vpack.c.bf16 %v383, %v380
      %v402 = vpack.c.bf16 %v387, %v384
      %v403 = vpack.c.bf16 %v388, %v385
      %v404 = vpack.c.bf16 %v389, %v386
      %v405 = vpack.c.bf16 %v390, %v390
      %v406 = vpack.c.bf16 %v391, %v391
      %v407 = vpack.c.bf16 %v392, %v392
      %v408 = vld [vmem:[%s2] sm:$0xff]
      %410 = vset.pattern.permute.xlu0 0
      %411 = vperm.xlu0 %410, %v408
      %v412 = vpop.permute.xlu0 %411
      %vm414 = vcmask 588800
      %v416 = vsel %vm414, %v365, 0
      %vm418 = vcmask 1043456
      %v420 = vsel %vm418, %v405, 0
      %v423 = vsel %vm418, %v406, 0
      %v426 = vsel %vm418, %v407, 0
      %428 = vmatprep.subr.bf16.mxu0 %v394
      %429 = vmatpush1.bf16.msra.mxu0 %v393
      %430 = vmatprep.subr.bf16.mxu0 %v397
      %431 = vmatpush1.bf16.msra.mxu0 %v396
      %432 = vmatprep.subr.bf16.mxu0 %v400
      %433 = vmatpush1.bf16.msra.mxu0 %v399
      %434 = vmatprep.subr.bf16.mxu0 %v403
      %435 = vmatpush1.bf16.msra.mxu0 %v402
      %436 = vmatprep.subr.bf16.mxu0 %v423
      %437 = vmatpush1.bf16.msra.mxu0 %v420
      %438 = vmatprep.subr.bf16.mxu0 0
      %439 = vmatpush1.bf16.msra.mxu0 0
      %440 = vmatprep.subr.bf16.mxu0 0
      %441 = vmatpush1.bf16.msra.mxu0 0
      %442 = vmatprep.subr.bf16.mxu0 0
      %443 = vmatpush1.bf16.msra.mxu0 0
      %444 = vmatprep.subr.bf16.mxu0 0
      %445 = vmatpush1.bf16.msra.mxu0 0
      %446 = vmatprep.subr.bf16.mxu0 0
      %447 = vmatpush1.bf16.msra.mxu0 0
      %448 = vmatprep.subr.bf16.mxu0 0
      %449 = vmatpush1.bf16.msra.mxu0 0
      %450 = vmatprep.subr.bf16.mxu0 0
      %451 = vmatpush1.bf16.msra.mxu0 0
      %452 = vmatprep.subr.bf16.mxu0 0
      %453 = vmatpush1.bf16.msra.mxu0 0
      %454 = vmatprep.subr.bf16.mxu0 0
      %455 = vmatpush1.bf16.msra.mxu0 0
      %456 = vmatprep.subr.bf16.mxu0 0
      %457 = vmatpush1.bf16.msra.mxu0 0
      %458 = vmatprep.subr.bf16.mxu0 0
      %459 = vmatpush1.bf16.msra.mxu0 0
      %460 = vmatprep.mubr.bf16.mxu0 0
      %461 = vmatmul.mubr.bf16.gmra.mrb[0].mxu0 %v416
      %v462 = vpop.f32.mrb[0].mxu0
      %v463 = vadd.f32 %v412, %v462
      %v464 = vpop.f32.mrb[0].mxu0
      %v465 = vadd.f32 %v412, %v464
      %v466 = vpop.f32.mrb[0].mxu0
      %v467 = vpop.f32.mrb[0].mxu0
      %468 = vdwg.mxu0
      %469 = vmatprep.subr.bf16.mxu0 0
      %470 = vmatpush1.bf16.msra.mxu0 %v395
      %471 = vmatprep.subr.bf16.mxu0 0
      %472 = vmatpush1.bf16.msra.mxu0 %v398
      %473 = vmatprep.subr.bf16.mxu0 0
      %474 = vmatpush1.bf16.msra.mxu0 %v401
      %475 = vmatprep.subr.bf16.mxu0 0
      %476 = vmatpush1.bf16.msra.mxu0 %v404
      %477 = vmatprep.subr.bf16.mxu0 0
      %478 = vmatpush1.bf16.msra.mxu0 %v426
      %479 = vmatprep.subr.bf16.mxu0 0
      %480 = vmatpush1.bf16.msra.mxu0 0
      %481 = vmatprep.subr.bf16.mxu0 0
      %482 = vmatpush1.bf16.msra.mxu0 0
      %483 = vmatprep.subr.bf16.mxu0 0
      %484 = vmatpush1.bf16.msra.mxu0 0
      %485 = vmatprep.subr.bf16.mxu0 0
      %486 = vmatpush1.bf16.msra.mxu0 0
      %487 = vmatprep.subr.bf16.mxu0 0
      %488 = vmatpush1.bf16.msra.mxu0 0
      %489 = vmatprep.subr.bf16.mxu0 0
      %490 = vmatpush1.bf16.msra.mxu0 0
      %491 = vmatprep.subr.bf16.mxu0 0
      %492 = vmatpush1.bf16.msra.mxu0 0
      %493 = vmatprep.subr.bf16.mxu0 0
      %494 = vmatpush1.bf16.msra.mxu0 0
      %495 = vmatprep.subr.bf16.mxu0 0
      %496 = vmatpush1.bf16.msra.mxu0 0
      %497 = vmatprep.subr.bf16.mxu0 0
      %498 = vmatpush1.bf16.msra.mxu0 0
      %499 = vmatprep.subr.bf16.mxu0 0
      %500 = vmatpush1.bf16.msra.mxu0 0
      %501 = vmatprep.mubr.bf16.mxu0 0
      %502 = vmatmul.mubr.bf16.gmra.mrb[0].mxu0 %v416
      %v503 = vpop.f32.mrb[0].mxu0
      %v504 = vadd.f32 %v412, %v503
      %v505 = vpop.f32.mrb[0].mxu0
      %v506 = vpop.f32.mrb[0].mxu0
      %v507 = vpop.f32.mrb[0].mxu0
      %508 = vdwg.mxu0
      %v509 = vmax.f32 %v463, 0.0
      %v510 = vmax.f32 %v465, 0.0
      %v511 = vmax.f32 %v504, 0.0
      %v512 = vld [vmem:[%s5] sm:$0x7]
      %v514 = vlaneseq
      %v515 = vshrl.u32 %v514, 7
      %v516 = vsub.s32 0, %v515
      %v517 = vrot.slane %v512, %v516
      %v518 = vlaneseq
      %v519 = vshrl.u32 %v518, 7
      %v520 = vsub.s32 1, %v519
      %v521 = vrot.slane %v512, %v520
      %v522 = vlaneseq
      %v523 = vshrl.u32 %v522, 7
      %v524 = vsub.s32 2, %v523
      %v525 = vrot.slane %v512, %v524
      %v529 = vmul.f32 %v509, %v517
      %v530 = vmul.f32 %v510, %v521
      %v531 = vmul.f32 %v511, %v525
      %532 = vrot.lane.b32.xlu0 %v529, 19
      %v533 = vpop.permute.xlu0 %532
      %534 = vrot.lane.b32.xlu0 %v530, 19
      %v535 = vpop.permute.xlu0 %534
      %536 = vrot.lane.b32.xlu0 %v531, 19
      %v537 = vpop.permute.xlu0 %536
      %v538 = vsel %vm264, %v535, %v537
      %v539 = vsel %vm264, %v533, %v535
      %v540 = vsel %vm264, %v537, %v533
      %541 = vst [vmem:[#allocation3] sm:$0xff] %v540
      %542 = vst [vmem:[#allocation3 + $0x8] sm:$0xff] %v539
      %543 = vst [vmem:[#allocation3 + $0x10] sm:$0xff] %v538
      %544 = vrot.lane.b32.xlu0 %v529, 18
      %v545 = vpop.permute.xlu0 %544
      %546 = vrot.lane.b32.xlu0 %v530, 18
      %v547 = vpop.permute.xlu0 %546
      %548 = vrot.lane.b32.xlu0 %v531, 18
      %v549 = vpop.permute.xlu0 %548
      %v550 = vsel %vm277, %v547, %v549
      %v551 = vsel %vm277, %v545, %v547
      %v552 = vsel %vm277, %v549, %v545
      %553 = vst [vmem:[#allocation3 + $0x18] sm:$0xff] %v552
      %554 = vst [vmem:[#allocation3 + $0x20] sm:$0xff] %v551
      %555 = vst [vmem:[#allocation3 + $0x28] sm:$0xff] %v550
      %556 = vrot.lane.b32.xlu0 %v529, 17
      %v557 = vpop.permute.xlu0 %556
      %558 = vrot.lane.b32.xlu0 %v530, 17
      %v559 = vpop.permute.xlu0 %558
      %560 = vrot.lane.b32.xlu0 %v531, 17
      %v561 = vpop.permute.xlu0 %560
      %v562 = vsel %vm290, %v559, %v561
      %v563 = vsel %vm290, %v557, %v559
      %v564 = vsel %vm290, %v561, %v557
      %565 = vst [vmem:[#allocation3 + $0x30] sm:$0xff] %v564
      %566 = vst [vmem:[#allocation3 + $0x38] sm:$0xff] %v563
      %567 = vst [vmem:[#allocation3 + $0x40] sm:$0xff] %v562
      %568 = vrot.lane.b32.xlu0 %v529, 1
      %v569 = vpop.permute.xlu0 %568
      %570 = vrot.lane.b32.xlu0 %v530, 1
      %v571 = vpop.permute.xlu0 %570
      %572 = vrot.lane.b32.xlu0 %v531, 1
      %v573 = vpop.permute.xlu0 %572
      %v574 = vsel %vm303, %v571, %v573
      %v575 = vsel %vm303, %v569, %v571
      %v576 = vsel %vm303, %v573, %v569
      %577 = vst [vmem:[#allocation3 + $0x48] sm:$0xff] %v576
      %578 = vst [vmem:[#allocation3 + $0x50] sm:$0xff] %v575
      %579 = vst [vmem:[#allocation3 + $0x58] sm:$0xff] %v574
      %580 = vst [vmem:[#allocation3 + $0x60] sm:$0xff] %v529
      %581 = vst [vmem:[#allocation3 + $0x68] sm:$0xff] %v530
      %582 = vst [vmem:[#allocation3 + $0x70] sm:$0xff] %v531
      %583 = vrot.lane.b32.xlu0 %v529, 127
      %v584 = vpop.permute.xlu0 %583
      %585 = vrot.lane.b32.xlu0 %v530, 127
      %v586 = vpop.permute.xlu0 %585
      %587 = vrot.lane.b32.xlu0 %v531, 127
      %v588 = vpop.permute.xlu0 %587
      %v589 = vsel %vm319, %v586, %v588
      %v590 = vsel %vm319, %v584, %v586
      %v591 = vsel %vm319, %v588, %v584
      %592 = vst [vmem:[#allocation3 + $0x78] sm:$0xff] %v590
      %593 = vst [vmem:[#allocation3 + $0x80] sm:$0xff] %v589
      %594 = vst [vmem:[#allocation3 + $0x88] sm:$0xff] %v591
      %595 = vrot.lane.b32.xlu0 %v529, 111
      %v596 = vpop.permute.xlu0 %595
      %597 = vrot.lane.b32.xlu0 %v530, 111
      %v598 = vpop.permute.xlu0 %597
      %599 = vrot.lane.b32.xlu0 %v531, 111
      %v600 = vpop.permute.xlu0 %599
      %v601 = vsel %vm332, %v598, %v600
      %v602 = vsel %vm332, %v596, %v598
      %v603 = vsel %vm332, %v600, %v596
      %604 = vst [vmem:[#allocation3 + $0x90] sm:$0xff] %v602
      %605 = vst [vmem:[#allocation3 + $0x98] sm:$0xff] %v601
      %606 = vst [vmem:[#allocation3 + $0xa0] sm:$0xff] %v603
      %607 = vrot.lane.b32.xlu0 %v529, 110
      %v608 = vpop.permute.xlu0 %607
      %609 = vrot.lane.b32.xlu0 %v530, 110
      %v610 = vpop.permute.xlu0 %609
      %611 = vrot.lane.b32.xlu0 %v531, 110
      %v612 = vpop.permute.xlu0 %611
      %v613 = vsel %vm345, %v610, %v612
      %v614 = vsel %vm345, %v608, %v610
      %v615 = vsel %vm345, %v612, %v608
      %616 = vst [vmem:[#allocation3 + $0xa8] sm:$0xff] %v614
      %617 = vst [vmem:[#allocation3 + $0xb0] sm:$0xff] %v613
      %618 = vst [vmem:[#allocation3 + $0xb8] sm:$0xff] %v615
      %619 = vrot.lane.b32.xlu0 %v529, 109
      %v620 = vpop.permute.xlu0 %619
      %621 = vrot.lane.b32.xlu0 %v530, 109
      %v622 = vpop.permute.xlu0 %621
      %623 = vrot.lane.b32.xlu0 %v531, 109
      %v624 = vpop.permute.xlu0 %623
      %v625 = vsel %vm358, %v622, %v624
      %v626 = vsel %vm358, %v620, %v622
      %v627 = vsel %vm358, %v624, %v620
      %628 = vst [vmem:[#allocation3 + $0xc0] sm:$0xff] %v626
      %629 = vst [vmem:[#allocation3 + $0xc8] sm:$0xff] %v625
      %630 = vst [vmem:[#allocation3 + $0xd0] sm:$0xff] %v627
      %v631 = vld [vmem:[%s3] sm:$0xf]
      %v632 = vld [vmem:[#allocation3] sm:$0xff]
      %v633 = vld [vmem:[#allocation3 + $0x8] sm:$0xff]
      %v634 = vld [vmem:[#allocation3 + $0x10] sm:$0xff]
      %v635 = vld [vmem:[#allocation3 + $0x18] sm:$0xff]
      %v636 = vld [vmem:[#allocation3 + $0x20] sm:$0xff]
      %v637 = vld [vmem:[#allocation3 + $0x28] sm:$0xff]
      %v638 = vld [vmem:[#allocation3 + $0x30] sm:$0xff]
      %v639 = vld [vmem:[#allocation3 + $0x38] sm:$0xff]
      %v640 = vld [vmem:[#allocation3 + $0x40] sm:$0xff]
      %v641 = vld [vmem:[#allocation3 + $0x48] sm:$0xff]
      %v642 = vld [vmem:[#allocation3 + $0x50] sm:$0xff]
      %v643 = vld [vmem:[#allocation3 + $0x58] sm:$0xff]
      %v644 = vld [vmem:[#allocation3 + $0x60] sm:$0xff]
      %v645 = vld [vmem:[#allocation3 + $0x68] sm:$0xff]
      %v646 = vld [vmem:[#allocation3 + $0x70] sm:$0xff]
      %v647 = vld [vmem:[#allocation3 + $0x78] sm:$0xff]
      %v648 = vld [vmem:[#allocation3 + $0x80] sm:$0xff]
      %v649 = vld [vmem:[#allocation3 + $0x88] sm:$0xff]
      %v650 = vld [vmem:[#allocation3 + $0x90] sm:$0xff]
      %v651 = vld [vmem:[#allocation3 + $0x98] sm:$0xff]
      %v652 = vld [vmem:[#allocation3 + $0xa0] sm:$0xff]
      %v653 = vld [vmem:[#allocation3 + $0xa8] sm:$0xff]
      %v654 = vld [vmem:[#allocation3 + $0xb0] sm:$0xff]
      %v655 = vld [vmem:[#allocation3 + $0xb8] sm:$0xff]
      %v656 = vld [vmem:[#allocation3 + $0xc0] sm:$0xff]
      %v657 = vld [vmem:[#allocation3 + $0xc8] sm:$0xff]
      %v658 = vld [vmem:[#allocation3 + $0xd0] sm:$0xff]
      %v659 = vpack.c.bf16 %v635, %v632
      %v660 = vpack.c.bf16 %v636, %v633
      %v661 = vpack.c.bf16 %v637, %v634
      %v662 = vpack.c.bf16 %v641, %v638
      %v663 = vpack.c.bf16 %v642, %v639
      %v664 = vpack.c.bf16 %v643, %v640
      %v665 = vpack.c.bf16 %v647, %v644
      %v666 = vpack.c.bf16 %v648, %v645
      %v667 = vpack.c.bf16 %v649, %v646
      %v668 = vpack.c.bf16 %v653, %v650
      %v669 = vpack.c.bf16 %v654, %v651
      %v670 = vpack.c.bf16 %v655, %v652
      %v671 = vpack.c.bf16 %v656, %v656
      %v672 = vpack.c.bf16 %v657, %v657
      %v673 = vpack.c.bf16 %v658, %v658
      %v674 = vld [vmem:[%s4] sm:$0xff]
      %676 = vset.pattern.permute.xlu0 0
      %677 = vperm.xlu0 %676, %v674
      %v678 = vpop.permute.xlu0 %677
      %v681 = vsel %vm414, %v631, 0
      %v684 = vsel %vm418, %v671, 0
      %v687 = vsel %vm418, %v672, 0
      %v690 = vsel %vm418, %v673, 0
      %692 = vmatprep.subr.bf16.mxu0 %v660
      %693 = vmatpush1.bf16.msra.mxu0 %v659
      %694 = vmatprep.subr.bf16.mxu0 %v663
      %695 = vmatpush1.bf16.msra.mxu0 %v662
      %696 = vmatprep.subr.bf16.mxu0 %v666
      %697 = vmatpush1.bf16.msra.mxu0 %v665
      %698 = vmatprep.subr.bf16.mxu0 %v669
      %699 = vmatpush1.bf16.msra.mxu0 %v668
      %700 = vmatprep.subr.bf16.mxu0 %v687
      %701 = vmatpush1.bf16.msra.mxu0 %v684
      %702 = vmatprep.subr.bf16.mxu0 0
      %703 = vmatpush1.bf16.msra.mxu0 0
      %704 = vmatprep.subr.bf16.mxu0 0
      %705 = vmatpush1.bf16.msra.mxu0 0
      %706 = vmatprep.subr.bf16.mxu0 0
      %707 = vmatpush1.bf16.msra.mxu0 0
      %708 = vmatprep.subr.bf16.mxu0 0
      %709 = vmatpush1.bf16.msra.mxu0 0
      %710 = vmatprep.subr.bf16.mxu0 0
      %711 = vmatpush1.bf16.msra.mxu0 0
      %712 = vmatprep.subr.bf16.mxu0 0
      %713 = vmatpush1.bf16.msra.mxu0 0
      %714 = vmatprep.subr.bf16.mxu0 0
      %715 = vmatpush1.bf16.msra.mxu0 0
      %716 = vmatprep.subr.bf16.mxu0 0
      %717 = vmatpush1.bf16.msra.mxu0 0
      %718 = vmatprep.subr.bf16.mxu0 0
      %719 = vmatpush1.bf16.msra.mxu0 0
      %720 = vmatprep.subr.bf16.mxu0 0
      %721 = vmatpush1.bf16.msra.mxu0 0
      %722 = vmatprep.subr.bf16.mxu0 0
      %723 = vmatpush1.bf16.msra.mxu0 0
      %724 = vmatprep.mubr.bf16.mxu0 0
      %725 = vmatmul.mubr.bf16.gmra.mrb[0].mxu0 %v681
      %v726 = vpop.f32.mrb[0].mxu0
      %v727 = vadd.f32 %v678, %v726
      %v728 = vpop.f32.mrb[0].mxu0
      %v729 = vadd.f32 %v678, %v728
      %v730 = vpop.f32.mrb[0].mxu0
      %v731 = vpop.f32.mrb[0].mxu0
      %732 = vdwg.mxu0
      %733 = vmatprep.subr.bf16.mxu0 0
      %734 = vmatpush1.bf16.msra.mxu0 %v661
      %735 = vmatprep.subr.bf16.mxu0 0
      %736 = vmatpush1.bf16.msra.mxu0 %v664
      %737 = vmatprep.subr.bf16.mxu0 0
      %738 = vmatpush1.bf16.msra.mxu0 %v667
      %739 = vmatprep.subr.bf16.mxu0 0
      %740 = vmatpush1.bf16.msra.mxu0 %v670
      %741 = vmatprep.subr.bf16.mxu0 0
      %742 = vmatpush1.bf16.msra.mxu0 %v690
      %743 = vmatprep.subr.bf16.mxu0 0
      %744 = vmatpush1.bf16.msra.mxu0 0
      %745 = vmatprep.subr.bf16.mxu0 0
      %746 = vmatpush1.bf16.msra.mxu0 0
      %747 = vmatprep.subr.bf16.mxu0 0
      %748 = vmatpush1.bf16.msra.mxu0 0
      %749 = vmatprep.subr.bf16.mxu0 0
      %750 = vmatpush1.bf16.msra.mxu0 0
      %751 = vmatprep.subr.bf16.mxu0 0
      %752 = vmatpush1.bf16.msra.mxu0 0
      %753 = vmatprep.subr.bf16.mxu0 0
      %754 = vmatpush1.bf16.msra.mxu0 0
      %755 = vmatprep.subr.bf16.mxu0 0
      %756 = vmatpush1.bf16.msra.mxu0 0
      %757 = vmatprep.subr.bf16.mxu0 0
      %758 = vmatpush1.bf16.msra.mxu0 0
      %759 = vmatprep.subr.bf16.mxu0 0
      %760 = vmatpush1.bf16.msra.mxu0 0
      %761 = vmatprep.subr.bf16.mxu0 0
      %762 = vmatpush1.bf16.msra.mxu0 0
      %763 = vmatprep.subr.bf16.mxu0 0
      %764 = vmatpush1.bf16.msra.mxu0 0
      %765 = vmatprep.mubr.bf16.mxu0 0
      %766 = vmatmul.mubr.bf16.gmra.mrb[0].mxu0 %v681
      %v767 = vpop.f32.mrb[0].mxu0
      %v768 = vadd.f32 %v678, %v767
      %v769 = vpop.f32.mrb[0].mxu0
      %v770 = vpop.f32.mrb[0].mxu0
      %v771 = vpop.f32.mrb[0].mxu0
      %772 = vdwg.mxu0
      %773 = vst [vmem:[%s251] sm:$0xff] %v727
      %774 = vst [vmem:[%s251 + $0x8] sm:$0xff] %v729
      %775 = vst [vmem:[%s251 + $0x10] sm:$0xff] %v768
      %p776 = scmp.lt.s32.totalorder %s17, 1
      %s777 = scalar_select %p776, %s17, 1
      %s778 = smul.addr %s777, 3
      %s779 = smul.addr %s778, 8
      %s780 = scalar_lea.vmem %s6, %s779
      // Predicated region
      $region45: #{feature_aggregation_forward.1} parent=43 // pred_check
        %p781 = pneg %p166
      $region46: #{feature_aggregation_forward.1} parent=43 // pred_check_branch
        %783 = sbr.rel (%p781) target = $region48
      $region47: #{feature_aggregation_forward.1} parent=43 // pred_region
        _
      $region48: #{feature_aggregation_forward.1} parent=43 // pred_fallthru
        _
    $region44: #{feature_aggregation_forward.1} parent=5 // pred_fallthru
      _
    %p784 = scmp.le.s32.totalorder 2, %s12
    // Predicated region
    $region49: #{feature_aggregation_forward.1} parent=5 // pred_check
      %p785 = pneg %p784
    $region50: #{feature_aggregation_forward.1} parent=5 // pred_check_branch
      %787 = sbr.rel (%p785) target = $region52
    $region51: #{feature_aggregation_forward.1} parent=5 // pred_region
      %s788 = ssub.s32 %s12, 2
      // Predicated region
      $region53: #{feature_aggregation_forward.1} parent=51 // pred_check
        %p789 = pneg %p172
      $region54: #{feature_aggregation_forward.1} parent=51 // pred_check_branch
        %791 = sbr.rel (%p789) target = $region56
      $region55: #{feature_aggregation_forward.1} parent=51 // pred_region
        %p792 = scmp.lt.s32.totalorder %s18, 1
        %s793 = scalar_select %p792, %s18, 1
        %s794 = smul.addr %s793, 3
        %s795 = smul.addr %s794, 8
        %s796 = scalar_lea.vmem %s6, %s795
      $region56: #{feature_aggregation_forward.1} parent=51 // pred_fallthru
        _
    $region52: #{feature_aggregation_forward.1} parent=5 // pred_fallthru
      _
  $region6: #{feature_aggregation_forward.1} parent=0 // loop_footer
    %s16 = sadd.s32 1, %s12
  $region7: #{feature_aggregation_forward.1} parent=0 // loop_footer_branch
    %11 = sbr.rel target = $region3
  $region8: #{feature_aggregation_forward.1} parent=0 // loop_exit
    _

</llo_original>
